<compile_context>
chip_gen: v5e
topology: v5e:2x2
jax: 0.10.0
libtpu: 0.0.40
codegen_flags: <defaults>
</compile_context>

<pallas_src>
import functools

import jax
import jax.numpy as jnp
from jax.experimental import pallas as pl
from jax.experimental.pallas import tpu as pltpu


# -----------------------------------------------------------------------------
# Pallas kernel: grid = (B,).  One batch per step; Chebyshev recursion on the
# features + fused K-reduction matmul + fused bias add, all inside the kernel.
# -----------------------------------------------------------------------------
def chebconv_kernel(l_ref, x_ref, w_ref, b_ref, o_ref, *, K):
    cdtype = l_ref.dtype                 # compute dtype (bf16 or f32)
    L = l_ref[...]                       # (N, N), VMEM-resident across batches
    x = x_ref[0]                         # (N, Cin)

    # Chebyshev recursion applied to the features (f32 arithmetic, MXU inputs
    # in the compute dtype).  K is a static Python int -> unrolled at trace time.
    zs = [x.astype(jnp.float32)]
    if K >= 2:
        zs.append(jnp.dot(L, x, preferred_element_type=jnp.float32))
    for _ in range(2, K):
        zk = 2.0 * jnp.dot(L, zs[-1].astype(cdtype),
                           preferred_element_type=jnp.float32) - zs[-2]
        zs.append(zk)

    # Fused reduction over the K orders: one lane-dense matmul
    # (N, K*Cin) @ (K*Cin, Cout_pad), f32 accumulation, then fused bias add.
    zall = zs[0] if K == 1 else jnp.concatenate(zs, axis=-1)
    out = jnp.dot(zall.astype(cdtype), w_ref[...],
                  preferred_element_type=jnp.float32)
    out = out + b_ref[...]               # (1, Cout_pad) f32, broadcast over N
    o_ref[0] = out.astype(o_ref.dtype)


def cheb_conv_pallas(L, x, w_stacked, bias_pad, *, out_dtype):
    """L: [N, N], x: [B, N, Cin], w_stacked: [K*Cin, Cout_pad] (compute dtype),
    bias_pad: [1, Cout_pad] (f32)."""
    N = L.shape[0]
    B, _, Cin = x.shape
    KC, Cout_pad = w_stacked.shape
    K = KC // Cin

    kernel = functools.partial(chebconv_kernel, K=K)

    return pl.pallas_call(
        kernel,
        out_shape=jax.ShapeDtypeStruct((B, N, Cout_pad), out_dtype),
        grid_spec=pltpu.PrefetchScalarGridSpec(
            num_scalar_prefetch=0,
            grid=(B,),
            in_specs=[
                pl.BlockSpec((N, N), lambda b: (0, 0)),           # L (resident)
                pl.BlockSpec((1, N, Cin), lambda b: (b, 0, 0)),   # X_b
                pl.BlockSpec((KC, Cout_pad), lambda b: (0, 0)),   # W (resident)
                pl.BlockSpec((1, Cout_pad), lambda b: (0, 0)),    # bias (resident)
            ],
            out_specs=pl.BlockSpec((1, N, Cout_pad), lambda b: (b, 0, 0)),
        ),
        compiler_params=pltpu.CompilerParams(
            dimension_semantics=("parallel",),
            vmem_limit_bytes=32 * 1024 * 1024),
    )(L, x, w_stacked, bias_pad)


# -----------------------------------------------------------------------------
# Glue (plain JAX): Laplacian normalization (same math as the torch module).
# -----------------------------------------------------------------------------
def get_laplacian(graph, normalize=True):
    if normalize:
        d = jnp.sum(graph, axis=-1) ** (-0.5)
        D = jnp.diag(d)
        L = jnp.eye(graph.shape[0], dtype=graph.dtype) - D @ graph @ D
    else:
        L = jnp.diag(jnp.sum(graph, axis=-1)) - graph
    return L


def cheb_polynomial(L, K):
    """[K, N, N] with T_0=I, T_1=L, T_k = 2 L T_{k-1} - T_{k-2} (reference only)."""
    N = L.shape[0]
    polys = [jnp.eye(N, dtype=jnp.float32)]
    if K > 1:
        polys.append(L.astype(jnp.float32))
    for _ in range(2, K):
        polys.append(2.0 * (L @ polys[-1]) - polys[-2])
    return jnp.stack(polys, axis=0)


def chebconv_forward(x, graph, weight, bias=None, normalize=True,
                     compute_dtype=jnp.bfloat16):
    """Full ChebConv forward.

    x: [B, N, Cin], graph: [N, N], weight: [K, 1, Cin, Cout] (K = torch K+1
    orders), bias: [1, 1, Cout] or None.
    """
    K, _, Cin, Cout = weight.shape
    L = get_laplacian(graph.astype(jnp.float32), normalize)

    # Stacked weight [K*Cin, Cout], zero-padded on the output-channel axis to a
    # multiple of 128 so the kernel's output stores are lane-dense.
    Cout_pad = ((Cout + 127) // 128) * 128
    w = weight.reshape(K * Cin, Cout)
    w = jnp.pad(w, ((0, 0), (0, Cout_pad - Cout)))

    # Bias padded to Cout_pad (zeros if the module has bias=False); added in f32
    # inside the kernel on the matmul accumulator.
    if bias is None:
        b = jnp.zeros((1, Cout_pad), dtype=jnp.float32)
    else:
        b = jnp.pad(bias.reshape(1, Cout).astype(jnp.float32),
                    ((0, 0), (0, Cout_pad - Cout)))

    out = cheb_conv_pallas(L.astype(compute_dtype),
                           x.astype(compute_dtype),
                           w.astype(compute_dtype),
                           b,
                           out_dtype=x.dtype)
    return out[..., :Cout]


# -----------------------------------------------------------------------------
# Demo / self-check
# -----------------------------------------------------------------------------
if __name__ == "__main__":
    key = jax.random.PRNGKey(0)
    k_g, k_x, k_w, k_b = jax.random.split(key, 4)

    B, N, in_c, out_c, K_cheb = 2, 16, 4, 8, 3      # module K=3 -> K+1=4 orders
    K = K_cheb + 1

    # Symmetric, non-negative adjacency with positive row sums.
    a = jax.random.uniform(k_g, (N, N), dtype=jnp.float32)
    graph = 0.5 * (a + a.T) + 0.1

    # Node features [B, N, in_c].
    x = jax.random.normal(k_x, (B, N, in_c), dtype=jnp.float32)

    # Xavier-normal-style weight init (same shapes as the torch module), small
    # non-zero bias so the bias path is exercised.
    fan_in, fan_out = 1 * in_c * out_c, K * in_c * out_c
    std = (2.0 / (fan_in + fan_out)) ** 0.5
    weight = std * jax.random.normal(k_w, (K, 1, in_c, out_c), dtype=jnp.float32)
    bias = 0.1 * jax.random.normal(k_b, (1, 1, out_c), dtype=jnp.float32)

    # Pure-JAX reference of the exact torch semantics (basis materialized).
    L = get_laplacian(graph, True)
    mul_L = cheb_polynomial(L, K)                               # [K, N, N]
    r = jnp.einsum('knm,bmc->kbnc', mul_L, x)                   # [K, B, N, Cin]
    r = jnp.einsum('kbnc,kco->kbno', r, weight[:, 0])           # [K, B, N, Cout]
    ref = jnp.sum(r, axis=0) + bias                             # [B, N, Cout]

    # f32 compute path (tight-ish check) and bf16 compute path (perf default).
    # Tolerances allow for TPU default matmul precision / bf16 MXU inputs and
    # the different (feature-recursion) association order vs the reference.
    out_f32 = jax.block_until_ready(
        chebconv_forward(x, graph, weight, bias, True, jnp.float32))
    out_bf16 = jax.block_until_ready(
        chebconv_forward(x, graph, weight, bias, True, jnp.bfloat16))

    assert out_f32.shape == (B, N, out_c)
    assert out_bf16.shape == (B, N, out_c)
    assert jnp.allclose(out_f32, ref, atol=5e-2, rtol=5e-2), "f32 mismatch vs reference"
    assert jnp.allclose(out_bf16, ref, atol=1.5e-1, rtol=1.5e-1), "bf16 mismatch vs reference"
    print("KERNEL_OK")
</pallas_src>

<mosaic_0001>
module attributes {stable_mosaic.version = 11 : i64} {
  func.func @chebconv_kernel(%arg0: i32, %arg1: memref<16x16xf32, #tpu.memory_space<vmem>>, %arg2: memref<1x16x4xf32, #tpu.memory_space<vmem>>, %arg3: memref<16x128xf32, #tpu.memory_space<vmem>>, %arg4: memref<1x128xf32, #tpu.memory_space<vmem>>, %arg5: memref<1x16x128xf32, #tpu.memory_space<vmem>>) attributes {dimension_semantics = [#tpu.dimension_semantics<parallel>], iteration_bounds = array<i64: 2>, scalar_prefetch = 0 : i64, scratch_operands = 0 : i64, tpu.core_type = #tpu.core_type<tc>, window_params = [{pipeline_mode = #tpu.pipeline_mode<synchronous>, transform_indices = @transform_0, window_bounds = array<i64: 16, 16>}, {transform_indices = @transform_1, window_bounds = array<i64: 1, 16, 4>}, {pipeline_mode = #tpu.pipeline_mode<synchronous>, transform_indices = @transform_2, window_bounds = array<i64: 16, 128>}, {pipeline_mode = #tpu.pipeline_mode<synchronous>, transform_indices = @transform_3, window_bounds = array<i64: 1, 128>}, {transform_indices = @transform_4, window_bounds = array<i64: 1, 16, 128>}]} {
    %c0 = arith.constant 0 : index
    %c0_0 = arith.constant 0 : index
    %0 = vector.load %arg1[%c0, %c0_0] : memref<16x16xf32, #tpu.memory_space<vmem>>, vector<16x16xf32>
    %c0_1 = arith.constant 0 : index
    %c0_2 = arith.constant 0 : index
    %c0_3 = arith.constant 0 : index
    %1 = vector.load %arg2[%c0_1, %c0_2, %c0_3] : memref<1x16x4xf32, #tpu.memory_space<vmem>>, vector<1x16x4xf32>
    %2 = vector.shape_cast %1 : vector<1x16x4xf32> to vector<16x4xf32>
    %cst = arith.constant dense<0.000000e+00> : vector<16x4xf32>
    %3 = tpu.matmul %0, %2, %cst {dimension_numbers = #tpu.dot_dimension_numbers<[1], [0], [0], [1], [0, 0, 1, 1], [], []>} : vector<16x16xf32>, vector<16x4xf32>, vector<16x4xf32> -> vector<16x4xf32>
    %cst_4 = arith.constant dense<0.000000e+00> : vector<16x4xf32>
    %4 = tpu.matmul %0, %3, %cst_4 {dimension_numbers = #tpu.dot_dimension_numbers<[1], [0], [0], [1], [0, 0, 1, 1], [], []>} : vector<16x16xf32>, vector<16x4xf32>, vector<16x4xf32> -> vector<16x4xf32>
    %cst_5 = arith.constant 2.000000e+00 : f32
    %5 = vector.broadcast %cst_5 : f32 to vector<16x4xf32>
    %6 = arith.mulf %5, %4 : vector<16x4xf32>
    %7 = arith.subf %6, %2 : vector<16x4xf32>
    %cst_6 = arith.constant dense<0.000000e+00> : vector<16x4xf32>
    %8 = tpu.matmul %0, %7, %cst_6 {dimension_numbers = #tpu.dot_dimension_numbers<[1], [0], [0], [1], [0, 0, 1, 1], [], []>} : vector<16x16xf32>, vector<16x4xf32>, vector<16x4xf32> -> vector<16x4xf32>
    %cst_7 = arith.constant 2.000000e+00 : f32
    %9 = vector.broadcast %cst_7 : f32 to vector<16x4xf32>
    %10 = arith.mulf %9, %8 : vector<16x4xf32>
    %11 = arith.subf %10, %3 : vector<16x4xf32>
    %12 = tpu.concatenate %2, %3, %7, %11 in 1 : vector<16x4xf32>, vector<16x4xf32>, vector<16x4xf32>, vector<16x4xf32> -> vector<16x16xf32>
    %c0_8 = arith.constant 0 : index
    %c0_9 = arith.constant 0 : index
    %13 = vector.load %arg3[%c0_8, %c0_9] : memref<16x128xf32, #tpu.memory_space<vmem>>, vector<16x128xf32>
    %cst_10 = arith.constant dense<0.000000e+00> : vector<16x128xf32>
    %14 = tpu.matmul %12, %13, %cst_10 {dimension_numbers = #tpu.dot_dimension_numbers<[1], [0], [0], [1], [0, 0, 1, 1], [], []>} : vector<16x16xf32>, vector<16x128xf32>, vector<16x128xf32> -> vector<16x128xf32>
    %c0_11 = arith.constant 0 : index
    %c0_12 = arith.constant 0 : index
    %15 = vector.load %arg4[%c0_11, %c0_12] : memref<1x128xf32, #tpu.memory_space<vmem>>, vector<1x128xf32>
    %16 = vector.broadcast %15 : vector<1x128xf32> to vector<16x128xf32>
    %17 = arith.addf %14, %16 : vector<16x128xf32>
    %c0_13 = arith.constant 0 : index
    %c0_14 = arith.constant 0 : index
    %c0_15 = arith.constant 0 : index
    %18 = vector.load %arg5[%c0_13, %c0_14, %c0_15] : memref<1x16x128xf32, #tpu.memory_space<vmem>>, vector<1x16x128xf32>
    %19 = vector.shape_cast %18 : vector<1x16x128xf32> to vector<16x128xf32>
    %20 = vector.shape_cast %17 : vector<16x128xf32> to vector<1x16x128xf32>
    tpu.vector_store %arg5[%c0_13, %c0_14, %c0_15], %20 {strides = array<i32>} : memref<1x16x128xf32, #tpu.memory_space<vmem>>, vector<1x16x128xf32>,
    return
  }
  func.func @transform_0(%arg0: i32) -> (i32, i32) {
    %c0_i32 = arith.constant 0 : i32
    %c0_i32_0 = arith.constant 0 : i32
    %c0_i32_1 = arith.constant 0 : i32
    return %c0_i32, %c0_i32_0 : i32, i32
  }
  func.func @transform_1(%arg0: i32) -> (i32, i32, i32) {
    %c0_i32 = arith.constant 0 : i32
    %c0_i32_0 = arith.constant 0 : i32
    %c0_i32_1 = arith.constant 0 : i32
    return %arg0, %c0_i32, %c0_i32_0 : i32, i32, i32
  }
  func.func @transform_2(%arg0: i32) -> (i32, i32) {
    %c0_i32 = arith.constant 0 : i32
    %c0_i32_0 = arith.constant 0 : i32
    %c0_i32_1 = arith.constant 0 : i32
    return %c0_i32, %c0_i32_0 : i32, i32
  }
  func.func @transform_3(%arg0: i32) -> (i32, i32) {
    %c0_i32 = arith.constant 0 : i32
    %c0_i32_0 = arith.constant 0 : i32
    %c0_i32_1 = arith.constant 0 : i32
    return %c0_i32, %c0_i32_0 : i32, i32
  }
  func.func @transform_4(%arg0: i32) -> (i32, i32, i32) {
    %c0_i32 = arith.constant 0 : i32
    %c0_i32_0 = arith.constant 0 : i32
    %c0_i32_1 = arith.constant 0 : i32
    return %arg0, %c0_i32, %c0_i32_0 : i32, i32, i32
  }
}

</mosaic_0001>

<llo_original>
// kernel: tpu_custom_call.1
$region0: #{tpu_custom_call.1}
  #allocation0 [shape = 'u32[]', space=smem, size = 0x4, offset = 0x4, fixed_abs, tag = 'smem constant byte address 0x4 - core index']
  #allocation1 [shape = 'u32[72,128]{1,0:T(1,128)}', space=vmem, size = 0x9000, scoped, tag = 'internal scratch']
  %s0 = inlined_call_operand.vmem [shape: f32[16,16], index: 0, kind: input, shape index: {}]
  %s1 = inlined_call_operand.vmem [shape: f32[2,16,4], index: 1, kind: input, shape index: {}]
  %s2 = inlined_call_operand.vmem [shape: f32[16,128], index: 2, kind: input, shape index: {}]
  %s3 = inlined_call_operand.vmem [shape: f32[1,128], index: 3, kind: input, shape index: {}]
  %s4 = inlined_call_operand.hbm [shape: f32[2,16,128], index: 4, kind: output, shape index: {}]
  %s5 = sld [smem:[#allocation0]]
  $region49: #{tpu_custom_call.1} parent=0
    _
  %s7 = ssub.s32 1, %s5
  %s8 = scalar_select 0, %s7, %s5
  $region1: #{tpu_custom_call.1} parent=0
    #allocation2 [shape = 'u8[16384]{0}', space=vmem, size = 0x4000, scoped, tag = 'output window, operand 0']
    #allocation3 [shape = 's32[2]{0}', space=sflag, size = 0x8, scoped, tag = 'scoped memory for tpu_custom_call.1']
    %9 = vsyncpa [#allocation3], 0
    %s10 = scalar_lea.sflag [#allocation3], 1
    %11 = vsyncpa %s10, 0
    loop: start=0, step=1, limit=4
    $region2: #{tpu_custom_call.1} parent=1 // loop_pre_header
      _
    $region3: #{tpu_custom_call.1} parent=1 // loop_header
      %s13 = sphi 0, %s17
      %p14 = scmp.ge.s32.totalorder %s13, 4
      %s21 = sphi 0, %s21
      %s23 = sphi 0, %s21
      %s24 = sphi 0, %s23
      %s38 = sphi 0, %s24
      %s44 = sphi 0, %s46
      %s47 = sphi 0, %s44
      %s48 = sphi 0, %s47
      %s64 = sphi 0, %s48
      %s68 = sphi 0, %s68
      %s70 = sphi 0, %s68
      %s71 = sphi 0, %s70
      %s85 = sphi 0, %s71
      %s89 = sphi 0, %s89
      %s91 = sphi 0, %s89
      %s92 = sphi 0, %s91
      %s106 = sphi 0, %s92
      %s112 = sphi 0, %s114
      %s115 = sphi 0, %s112
      %s116 = sphi 0, %s115
      %s132 = sphi 0, %s116
    $region4: #{tpu_custom_call.1} parent=1 // loop_header_branch
      %16 = sbr.rel (%p14) target = $region8
    $region5: #{tpu_custom_call.1} parent=1 // loop_body
      %s18 = ssub.s32 %s13, 1
      %s19 = ssub.s32 %s13, 2
      %s20 = sadd.s32 %s13, 1
      %s22 = sadd.s32 %s21, 1
      %p25 = scmp.eq.s32.totalorder %s13, 1
      %p26 = scmp.ne.s32.totalorder %s21, %s23
      %p27 = scmp.eq.s32.totalorder %s13, 0
      %p28 = por %p26, %p27
      %p29 = scmp.ne.s32.totalorder %s21, %s23
      %p30 = scmp.eq.s32.totalorder %s18, 1
      %p31 = por %p29, %p30
      %p32 = scmp.ne.s32.totalorder %s23, %s24
      %p33 = scmp.eq.s32.totalorder %s18, 0
      %p34 = por %p32, %p33
      %p35 = scmp.ne.s32.totalorder %s23, %s24
      %p36 = scmp.eq.s32.totalorder %s19, 1
      %p37 = por %p35, %p36
      %p39 = scmp.ne.s32.totalorder %s24, %s38
      %p40 = scmp.eq.s32.totalorder %s19, 0
      %p41 = por %p39, %p40
      %s42 = ssub.s32 %s13, %s20
      %p43 = scmp.eq.s32.totalorder %s42, 0
      %s45 = sadd.s32 %s44, 1
      %s46 = scalar_select %p43, %s44, %s45
      %p49 = pneg %p43
      %p50 = scmp.eq.s32.totalorder %s13, 1
      %p51 = por %p49, %p50
      %p52 = scmp.ne.s32.totalorder %s44, %s47
      %p53 = scmp.eq.s32.totalorder %s13, 0
      %p54 = por %p52, %p53
      %p55 = scmp.ne.s32.totalorder %s44, %s47
      %p56 = scmp.eq.s32.totalorder %s18, 1
      %p57 = por %p55, %p56
      %p58 = scmp.ne.s32.totalorder %s47, %s48
      %p59 = scmp.eq.s32.totalorder %s18, 0
      %p60 = por %p58, %p59
      %p61 = scmp.ne.s32.totalorder %s47, %s48
      %p62 = scmp.eq.s32.totalorder %s19, 1
      %p63 = por %p61, %p62
      %p65 = scmp.ne.s32.totalorder %s48, %s64
      %p66 = scmp.eq.s32.totalorder %s19, 0
      %p67 = por %p65, %p66
      %s69 = sadd.s32 %s68, 1
      %p72 = scmp.eq.s32.totalorder %s13, 1
      %p73 = scmp.ne.s32.totalorder %s68, %s70
      %p74 = scmp.eq.s32.totalorder %s13, 0
      %p75 = por %p73, %p74
      %p76 = scmp.ne.s32.totalorder %s68, %s70
      %p77 = scmp.eq.s32.totalorder %s18, 1
      %p78 = por %p76, %p77
      %p79 = scmp.ne.s32.totalorder %s70, %s71
      %p80 = scmp.eq.s32.totalorder %s18, 0
      %p81 = por %p79, %p80
      %p82 = scmp.ne.s32.totalorder %s70, %s71
      %p83 = scmp.eq.s32.totalorder %s19, 1
      %p84 = por %p82, %p83
      %p86 = scmp.ne.s32.totalorder %s71, %s85
      %p87 = scmp.eq.s32.totalorder %s19, 0
      %p88 = por %p86, %p87
      %s90 = sadd.s32 %s89, 1
      %p93 = scmp.eq.s32.totalorder %s13, 1
      %p94 = scmp.ne.s32.totalorder %s89, %s91
      %p95 = scmp.eq.s32.totalorder %s13, 0
      %p96 = por %p94, %p95
      %p97 = scmp.ne.s32.totalorder %s89, %s91
      %p98 = scmp.eq.s32.totalorder %s18, 1
      %p99 = por %p97, %p98
      %p100 = scmp.ne.s32.totalorder %s91, %s92
      %p101 = scmp.eq.s32.totalorder %s18, 0
      %p102 = por %p100, %p101
      %p103 = scmp.ne.s32.totalorder %s91, %s92
      %p104 = scmp.eq.s32.totalorder %s19, 1
      %p105 = por %p103, %p104
      %p107 = scmp.ne.s32.totalorder %s92, %s106
      %p108 = scmp.eq.s32.totalorder %s19, 0
      %p109 = por %p107, %p108
      %s110 = ssub.s32 %s13, %s20
      %p111 = scmp.eq.s32.totalorder %s110, 0
      %s113 = sadd.s32 %s112, 1
      %s114 = scalar_select %p111, %s112, %s113
      %p117 = pneg %p111
      %p118 = scmp.eq.s32.totalorder %s13, 1
      %p119 = por %p117, %p118
      %p120 = scmp.ne.s32.totalorder %s112, %s115
      %p121 = scmp.eq.s32.totalorder %s13, 0
      %p122 = por %p120, %p121
      %p123 = scmp.ne.s32.totalorder %s112, %s115
      %p124 = scmp.eq.s32.totalorder %s18, 1
      %p125 = por %p123, %p124
      %p126 = scmp.ne.s32.totalorder %s115, %s116
      %p127 = scmp.eq.s32.totalorder %s18, 0
      %p128 = por %p126, %p127
      %p129 = scmp.ne.s32.totalorder %s115, %s116
      %p130 = scmp.eq.s32.totalorder %s19, 1
      %p131 = por %p129, %p130
      %p133 = scmp.ne.s32.totalorder %s116, %s132
      %p134 = scmp.eq.s32.totalorder %s19, 0
      %p135 = por %p133, %p134
      %p136 = scmp.le.s32.totalorder 1, %s13
      %p137 = scmp.lt.s32.totalorder %s13, 3
      %p138 = pnand %p136, %p137
      %p139 = pneg %p138
      // Predicated region
      $region9: #{tpu_custom_call.1} parent=5 // pred_check
        _
      $region10: #{tpu_custom_call.1} parent=5 // pred_check_branch
        %141 = sbr.rel (%p138) target = $region12
      $region11: #{tpu_custom_call.1} parent=5 // pred_region
        %s142 = ssub.s32 %s13, 1
        // Predicated region
        $region13: #{tpu_custom_call.1} parent=11 // pred_check
          %p143 = pneg %p34
        $region14: #{tpu_custom_call.1} parent=11 // pred_check_branch
          %145 = sbr.rel (%p143) target = $region16
        $region15: #{tpu_custom_call.1} parent=11 // pred_region
          _
        $region16: #{tpu_custom_call.1} parent=11 // pred_fallthru
          _
        // Predicated region
        $region17: #{tpu_custom_call.1} parent=11 // pred_check
          %p146 = pneg %p81
        $region18: #{tpu_custom_call.1} parent=11 // pred_check_branch
          %148 = sbr.rel (%p146) target = $region20
        $region19: #{tpu_custom_call.1} parent=11 // pred_region
          _
        $region20: #{tpu_custom_call.1} parent=11 // pred_fallthru
          _
        // Predicated region
        $region21: #{tpu_custom_call.1} parent=11 // pred_check
          %p149 = pneg %p102
        $region22: #{tpu_custom_call.1} parent=11 // pred_check_branch
          %151 = sbr.rel (%p149) target = $region24
        $region23: #{tpu_custom_call.1} parent=11 // pred_region
          _
        $region24: #{tpu_custom_call.1} parent=11 // pred_fallthru
          _
      $region12: #{tpu_custom_call.1} parent=5 // pred_fallthru
        _
      %p152 = scmp.lt.s32.totalorder %s13, 2
      // Predicated region
      $region25: #{tpu_custom_call.1} parent=5 // pred_check
        %p153 = pneg %p152
      $region26: #{tpu_custom_call.1} parent=5 // pred_check_branch
        %155 = sbr.rel (%p153) target = $region28
      $region27: #{tpu_custom_call.1} parent=5 // pred_region
        // Predicated region
        $region29: #{tpu_custom_call.1} parent=27 // pred_check
          %p156 = pneg %p54
        $region30: #{tpu_custom_call.1} parent=27 // pred_check_branch
          %158 = sbr.rel (%p156) target = $region32
        $region31: #{tpu_custom_call.1} parent=27 // pred_region
          %p159 = scmp.lt.s32.totalorder %s13, 1
          %s160 = scalar_select %p159, %s13, 1
          %s161 = smul.addr %s160, 2
          %s162 = smul.addr %s161, 8
          %s163 = scalar_lea.vmem %s1, %s162
        $region32: #{tpu_custom_call.1} parent=27 // pred_fallthru
          _
      $region28: #{tpu_custom_call.1} parent=5 // pred_fallthru
        _
      %p164 = scmp.le.s32.totalorder 1, %s13
      %p165 = scmp.lt.s32.totalorder %s13, 3
      %p166 = pnand %p164, %p165
      %p167 = pneg %p166
      // Predicated region
      $region33: #{tpu_custom_call.1} parent=5 // pred_check
        _
      $region34: #{tpu_custom_call.1} parent=5 // pred_check_branch
        %169 = sbr.rel (%p166) target = $region36
      $region35: #{tpu_custom_call.1} parent=5 // pred_region
        %s170 = ssub.s32 %s13, 1
        %p171 = pneg %p34
        %p172 = pneg %p31
        %p173 = scmp.lt.s32.totalorder %s18, 1
        %s174 = scalar_select %p173, %s18, 1
        %s175 = smul.addr %s174, 2
        %s176 = smul.addr %s175, 8
        %s177 = scalar_lea.vmem %s1, %s176
        %p178 = pneg %p60
        %p179 = pneg %p57
        %p180 = pneg %p81
        %p181 = pneg %p78
        %p182 = pneg %p102
        %p183 = pneg %p99
        %p184 = pneg %p128
        %p185 = pneg %p125
        %s186 = sand.u32 %s115, 1
        %s187 = scalar_lea.sflag [#allocation3], %s186
        %s188 = sand.u32 %s115, 1
        %s189 = smul.addr %s188, 16
        %s190 = scalar_lea.vmem [#allocation2], %s189
        %p191 = scmp.lt.s32.totalorder %s18, 1
        %s192 = scalar_select %p191, %s18, 1
        %s193 = smul.addr %s192, 2
        %s194 = smul.addr %s193, 8
        %s195 = scalar_lea.vmem %s1, %s194
        %v196 = vld [vmem:[%s0] sm:$0xff]
        %v197 = vld [vmem:[%s0 + $0x8] sm:$0xff]
        %v198 = vld [vmem:[%s195] sm:$0xff]
        %v199 = vld [vmem:[%s195 + $0x8] sm:$0xff]
        %vm200 = vcmask 130048
        %v202 = vsel %vm200, %v196, 0
        %v205 = vsel %vm200, %v197, 0
        %207 = vmatpush.msra.mxu0 0.0
        %208 = vmatpush.msra.mxu0 0.0
        %209 = vmatpush.msra.mxu0 0.0
        %210 = vmatpush.msra.mxu0 0.0
        %211 = vmatpush.msra.mxu0 0.0
        %212 = vmatpush.msra.mxu0 0.0
        %213 = vmatpush.msra.mxu0 0.0
        %214 = vmatpush.msra.mxu0 0.0
        %215 = vmatpush.msra.mxu0 0.0
        %216 = vmatpush.msra.mxu0 0.0
        %217 = vmatpush.msra.mxu0 0.0
        %218 = vmatpush.msra.mxu0 0.0
        %219 = vmatpush.msra.mxu0 0.0
        %220 = vmatpush.msra.mxu0 0.0
        %221 = vmatpush.msra.mxu0 %v199
        %222 = vmatpush.msra.mxu0 %v198
        %223 = vmatmul.f32.gmra.mxu0 %v202
        %v224 = vpop.f32.mrf.mxu0
        %v225 = vadd.f32 0.0, %v224
        %226 = vmatmul.f32.gmra.mxu0 %v205
        %v227 = vpop.f32.mrf.mxu0
        %v228 = vadd.f32 0.0, %v227
        %229 = vdwg.mxu0
        %230 = vmatpush.msra.mxu0 0.0
        %231 = vmatpush.msra.mxu0 0.0
        %232 = vmatpush.msra.mxu0 0.0
        %233 = vmatpush.msra.mxu0 0.0
        %234 = vmatpush.msra.mxu0 0.0
        %235 = vmatpush.msra.mxu0 0.0
        %236 = vmatpush.msra.mxu0 0.0
        %237 = vmatpush.msra.mxu0 0.0
        %238 = vmatpush.msra.mxu0 0.0
        %239 = vmatpush.msra.mxu0 0.0
        %240 = vmatpush.msra.mxu0 0.0
        %241 = vmatpush.msra.mxu0 0.0
        %242 = vmatpush.msra.mxu0 0.0
        %243 = vmatpush.msra.mxu0 0.0
        %244 = vmatpush.msra.mxu0 %v228
        %245 = vmatpush.msra.mxu0 %v225
        %246 = vmatmul.f32.gmra.mxu0 %v202
        %v247 = vpop.f32.mrf.mxu0
        %v248 = vadd.f32 0.0, %v247
        %249 = vmatmul.f32.gmra.mxu0 %v205
        %v250 = vpop.f32.mrf.mxu0
        %v251 = vadd.f32 0.0, %v250
        %252 = vdwg.mxu0
        %v253 = vmul.f32 %v248, 2.0
        %v254 = vmul.f32 %v251, 2.0
        %v255 = vsub.f32 %v253, %v198
        %v256 = vsub.f32 %v254, %v199
        %257 = vmatpush.msra.mxu0 0.0
        %258 = vmatpush.msra.mxu0 0.0
        %259 = vmatpush.msra.mxu0 0.0
        %260 = vmatpush.msra.mxu0 0.0
        %261 = vmatpush.msra.mxu0 0.0
        %262 = vmatpush.msra.mxu0 0.0
        %263 = vmatpush.msra.mxu0 0.0
        %264 = vmatpush.msra.mxu0 0.0
        %265 = vmatpush.msra.mxu0 0.0
        %266 = vmatpush.msra.mxu0 0.0
        %267 = vmatpush.msra.mxu0 0.0
        %268 = vmatpush.msra.mxu0 0.0
        %269 = vmatpush.msra.mxu0 0.0
        %270 = vmatpush.msra.mxu0 0.0
        %271 = vmatpush.msra.mxu0 %v256
        %272 = vmatpush.msra.mxu0 %v255
        %273 = vmatmul.f32.gmra.mxu0 %v202
        %v274 = vpop.f32.mrf.mxu0
        %v275 = vadd.f32 0.0, %v274
        %276 = vmatmul.f32.gmra.mxu0 %v205
        %v277 = vpop.f32.mrf.mxu0
        %v278 = vadd.f32 0.0, %v277
        %279 = vdwg.mxu0
        %v280 = vmul.f32 %v275, 2.0
        %v281 = vmul.f32 %v278, 2.0
        %v282 = vsub.f32 %v280, %v225
        %v283 = vsub.f32 %v281, %v228
        %286 = vrot.lane.b32.xlu0 %v225, 4
        %v287 = vpop.permute.xlu0 %286
        %288 = vrot.lane.b32.xlu0 %v228, 4
        %v289 = vpop.permute.xlu0 %288
        %294 = vrot.lane.b32.xlu0 %v255, 8
        %v295 = vpop.permute.xlu0 %294
        %296 = vrot.lane.b32.xlu0 %v256, 8
        %v297 = vpop.permute.xlu0 %296
        %302 = vrot.lane.b32.xlu0 %v282, 12
        %v303 = vpop.permute.xlu0 %302
        %304 = vrot.lane.b32.xlu0 %v283, 12
        %v305 = vpop.permute.xlu0 %304
        %vm308 = vcmask 31744
        %v309 = vsel %vm308, %v198, %v287
        %v310 = vsel %vm308, %v199, %v289
        %vm311 = vcmask 64512
        %v312 = vsel %vm311, %v309, %v295
        %v313 = vsel %vm311, %v310, %v297
        %vm314 = vcmask 97280
        %v315 = vsel %vm314, %v312, %v303
        %v316 = vsel %vm314, %v313, %v305
        %v317 = vld [vmem:[%s2] sm:$0xff]
        %v318 = vld [vmem:[%s2 + $0x8] sm:$0xff]
        %v319 = vld [vmem:[%s3] sm:$0x1]
        %v321 = vperm.slane %v319, 0
        %v324 = vsel %vm200, %v315, 0
        %v327 = vsel %vm200, %v316, 0
        %329 = vmatpush.msra.mxu0 0.0
        %330 = vmatpush.msra.mxu0 0.0
        %331 = vmatpush.msra.mxu0 0.0
        %332 = vmatpush.msra.mxu0 0.0
        %333 = vmatpush.msra.mxu0 0.0
        %334 = vmatpush.msra.mxu0 0.0
        %335 = vmatpush.msra.mxu0 0.0
        %336 = vmatpush.msra.mxu0 0.0
        %337 = vmatpush.msra.mxu0 0.0
        %338 = vmatpush.msra.mxu0 0.0
        %339 = vmatpush.msra.mxu0 0.0
        %340 = vmatpush.msra.mxu0 0.0
        %341 = vmatpush.msra.mxu0 0.0
        %342 = vmatpush.msra.mxu0 0.0
        %343 = vmatpush.msra.mxu0 %v318
        %344 = vmatpush.msra.mxu0 %v317
        %345 = vmatmul.f32.gmra.mxu0 %v324
        %v346 = vpop.f32.mrf.mxu0
        %v347 = vadd.f32 %v321, %v346
        %348 = vmatmul.f32.gmra.mxu0 %v327
        %v349 = vpop.f32.mrf.mxu0
        %v350 = vadd.f32 %v321, %v349
        %351 = vdwg.mxu0
        %352 = vst [vmem:[%s190] sm:$0xff] %v347
        %353 = vst [vmem:[%s190 + $0x8] sm:$0xff] %v350
        %s354 = sand.u32 %s115, 1
        %s355 = scalar_lea.sflag [#allocation3], %s354
        %s356 = sand.u32 %s115, 1
        %s357 = smul.addr %s356, 16
        %s358 = scalar_lea.vmem [#allocation2], %s357
        // Predicated region
        $region37: #{tpu_custom_call.1} parent=35 // pred_check
          %p359 = pneg %p125
        $region38: #{tpu_custom_call.1} parent=35 // pred_check_branch
          %361 = sbr.rel (%p359) target = $region40
        $region39: #{tpu_custom_call.1} parent=35 // pred_region
          %363 = vsyncadd %s355, 0
          %s364 = smul.addr %s18, 2
          %s365 = smul.addr %s364, 8
          %s366 = scalar_lea.hbm %s4, %s365
          %s367 = sshll.u32 %s358, 4
          %s368 = int_to_ptr.vmem [resolvable:$true] %s367
          %s369 = sshll.u32 %s366, 4
          %s370 = int_to_ptr.hbm [resolvable:$true] %s369
          %375 = dma.vmem_to_hbm [thread:$0]  %s368, 256, %s370, %s355, 128, 128, 8
        $region40: #{tpu_custom_call.1} parent=35 // pred_fallthru
          _
      $region36: #{tpu_custom_call.1} parent=5 // pred_fallthru
        _
      %p376 = scmp.le.s32.totalorder 2, %s13
      // Predicated region
      $region41: #{tpu_custom_call.1} parent=5 // pred_check
        %p377 = pneg %p376
      $region42: #{tpu_custom_call.1} parent=5 // pred_check_branch
        %379 = sbr.rel (%p377) target = $region44
      $region43: #{tpu_custom_call.1} parent=5 // pred_region
        %s380 = ssub.s32 %s13, 2
        // Predicated region
        $region45: #{tpu_custom_call.1} parent=43 // pred_check
          %p381 = pneg %p131
        $region46: #{tpu_custom_call.1} parent=43 // pred_check_branch
          %383 = sbr.rel (%p381) target = $region48
        $region47: #{tpu_custom_call.1} parent=43 // pred_region
          %s384 = sand.u32 %s116, 1
          %s385 = scalar_lea.sflag [#allocation3], %s384
          %s386 = sand.u32 %s116, 1
          %s387 = smul.addr %s386, 16
          %s388 = scalar_lea.vmem [#allocation2], %s387
          %390 = dma.done %s385, 256
        $region48: #{tpu_custom_call.1} parent=43 // pred_fallthru
          _
      $region44: #{tpu_custom_call.1} parent=5 // pred_fallthru
        _
    $region6: #{tpu_custom_call.1} parent=1 // loop_footer
      %s17 = sadd.s32 1, %s13
    $region7: #{tpu_custom_call.1} parent=1 // loop_footer_branch
      %12 = sbr.rel target = $region3
    $region8: #{tpu_custom_call.1} parent=1 // loop_exit
      _
    %391 = vsyncpa [#allocation3], 1
    %s392 = scalar_lea.sflag [#allocation3], 1
    %393 = vsyncpa %s392, 1

</llo_original>
